<compile_context>
chip_gen: v7x
topology: tpu7x:2x2x1
jax: 0.10.0
libtpu: 0.0.40
codegen_flags: <defaults>
</compile_context>

<pallas_src>
import functools

import jax
import jax.numpy as jnp
from jax.experimental import pallas as pl
from jax.experimental.pallas import tpu as pltpu


def _round_up(x, m):
    return ((x + m - 1) // m) * m


def sage_conv_kernel(adj_ref, xk_ref, xi_ref, w_ref, b_ref, o_ref, acc_ref, *, fin):
    k = pl.program_id(1)

    @pl.when(k == 0)
    def _init():
        acc_ref[...] = jnp.zeros_like(acc_ref)

    # Accumulate [A@x | deg | 0...] for this row tile (bf16 MXU, f32 accumulation).
    acc_ref[...] += jnp.dot(adj_ref[...], xk_ref[...],
                            preferred_element_type=jnp.float32)

    @pl.when(k == pl.num_programs(1) - 1)
    def _finalize():
        acc = acc_ref[...]                                  # [bn, 128] f32
        deg = jnp.maximum(acc[:, fin:fin + 1], 1.0)         # [bn, 1]
        # Mean aggregation: scale accumulated sums by 1/deg (EUP reciprocal).
        neigh = acc * pl.reciprocal(deg, approx=True)       # [bn, 128]

        # Fused projection: [x_self | neigh] @ [[W_self],[W_neigh]]  (single K=256 dot).
        feat = jnp.concatenate([xi_ref[...], neigh.astype(jnp.bfloat16)], axis=1)
        h = jnp.dot(feat, w_ref[...],
                    preferred_element_type=jnp.float32) + b_ref[...]

        # leaky_relu (negative_slope = 0.01)
        h = jnp.where(h > 0, h, 0.01 * h)

        # Row-wise L2 normalize. Padded output lanes are exactly zero (zero weights +
        # zero bias -> 0 through leaky_relu), so the norm matches the unpadded norm.
        sumsq = jnp.sum(h * h, axis=1, keepdims=True)
        inv_norm = jax.lax.rsqrt(jnp.maximum(sumsq, 1e-24))  # == 1/max(||h||, 1e-12)
        o_ref[...] = (h * inv_norm).astype(o_ref.dtype)


def sage_conv_layer(adj, x, w_self, w_neigh, b, *, block_n=256):
    """adj: [N, N], x: [N, Fin], w_*: [Fin, Fout], b: [1, Fout] -> [N, Fout] (f32)."""
    N, fin = x.shape
    fout = w_self.shape[1]
    assert adj.shape == (N, N)
    assert block_n % 128 == 0
    assert fin + 1 <= 128, "feature augmentation assumes Fin < 128"
    # TODO(synk): sparse (edge-list) graphs would need scalar-prefetch gather; dense
    # adjacency is used here as the graph representation.

    FA = 128                                   # lane-padded width of [x | 1 | 0...]
    FP = _round_up(fout, 128)                  # lane-dense output width

    bn = max(128, min(block_n, _round_up(N, 128)))   # don't over-pad tiny graphs
    n_pad = _round_up(N, bn)

    # Augmented node features [x | 1 | 0...], lane-padded, bf16 for the MXU.
    x_aug = jnp.zeros((n_pad, FA), dtype=jnp.float32)
    x_aug = x_aug.at[:N, :fin].set(x)
    x_aug = x_aug.at[:, fin].set(1.0)
    x_aug = x_aug.astype(jnp.bfloat16)

    # Zero-padded adjacency (padded cols contribute nothing to real rows), bf16 exact.
    adj_p = jnp.zeros((n_pad, n_pad), dtype=jnp.float32).at[:N, :N].set(adj)
    adj_p = adj_p.astype(jnp.bfloat16)

    # Pre-stacked projection weights: rows [0:Fin] = W_self, rows [FA:FA+Fin] = W_neigh.
    w_cat = jnp.zeros((2 * FA, FP), dtype=jnp.float32)
    w_cat = w_cat.at[:fin, :fout].set(w_self)
    w_cat = w_cat.at[FA:FA + fin, :fout].set(w_neigh)
    w_cat = w_cat.astype(jnp.bfloat16)

    b_pad = jnp.zeros((1, FP), dtype=jnp.float32).at[:, :fout].set(b.reshape(1, fout))

    kernel = functools.partial(sage_conv_kernel, fin=fin)
    grid = (n_pad // bn, n_pad // bn)          # (row tiles, reduction over adj columns)

    out = pl.pallas_call(
        kernel,
        out_shape=jax.ShapeDtypeStruct((n_pad, FP), jnp.float32),
        grid_spec=pltpu.PrefetchScalarGridSpec(
            num_scalar_prefetch=0,
            grid=grid,
            in_specs=[
                pl.BlockSpec((bn, bn), lambda i, k: (i, k)),        # adjacency tile
                pl.BlockSpec((bn, FA), lambda i, k: (k, 0)),        # x_aug (neighbors)
                pl.BlockSpec((bn, FA), lambda i, k: (i, 0)),        # x_aug (self rows)
                pl.BlockSpec((2 * FA, FP), lambda i, k: (0, 0)),    # stacked weights
                pl.BlockSpec((1, FP), lambda i, k: (0, 0)),         # bias
            ],
            out_specs=pl.BlockSpec((bn, FP), lambda i, k: (i, 0)),
            scratch_shapes=[pltpu.VMEM((bn, FA), jnp.float32)],     # [A@x | deg] acc
        ),
        compiler_params=pltpu.CompilerParams(
            dimension_semantics=("parallel", "arbitrary"),
            vmem_limit_bytes=32 * 1024 * 1024,
        ),
    )(adj_p, x_aug, x_aug, w_cat, b_pad)

    return out[:N, :fout]


if __name__ == "__main__":
    N = 256          # number of graph nodes
    in_feats = 32
    out_feats = 32

    key = jax.random.PRNGKey(0)
    k_adj, k_x, k_ws, k_wn, k_b = jax.random.split(key, 5)

    # Random directed graph as dense adjacency (row i aggregates its in-neighbors).
    adj = (jax.random.uniform(k_adj, (N, N)) < 0.05).astype(jnp.float32)
    adj = adj * (1.0 - jnp.eye(N, dtype=jnp.float32))  # no self loops

    x = jax.random.normal(k_x, (N, in_feats), dtype=jnp.float32)
    w_self = jax.random.normal(k_ws, (in_feats, out_feats), dtype=jnp.float32) * 0.1
    w_neigh = jax.random.normal(k_wn, (in_feats, out_feats), dtype=jnp.float32) * 0.1
    b = jax.random.normal(k_b, (1, out_feats), dtype=jnp.float32) * 0.1

    # block_n=128 -> grid (2, 2): exercises both the parallel row axis and the
    # accumulator reduction axis.
    out = sage_conv_layer(adj, x, w_self, w_neigh, b, block_n=128)
    jax.block_until_ready(out)

    # Pure-JAX f32 reference.
    deg = jnp.maximum(jnp.sum(adj, axis=1, keepdims=True), 1.0)
    neigh = (adj @ x) / deg
    h_ref = x @ w_self + neigh @ w_neigh + b
    h_ref = jnp.where(h_ref > 0, h_ref, 0.01 * h_ref)
    h_ref = h_ref / jnp.maximum(
        jnp.sqrt(jnp.sum(h_ref * h_ref, axis=1, keepdims=True)), 1e-12)

    assert out.shape == (N, out_feats)
    err = jnp.max(jnp.abs(out - h_ref))
    assert bool(err < 2e-2), f"max abs err {err}"  # bf16 MXU operands, f32 accumulation
    print("KERNEL_OK")
</pallas_src>

<mosaic_0001>
module attributes {stable_mosaic.version = 11 : i64} {
  func.func @sage_conv_kernel(%arg0: i32, %arg1: i32, %arg2: memref<128x128xbf16, #tpu.memory_space<vmem>>, %arg3: memref<128x128xbf16, #tpu.memory_space<vmem>>, %arg4: memref<128x128xbf16, #tpu.memory_space<vmem>>, %arg5: memref<256x128xbf16, #tpu.memory_space<vmem>>, %arg6: memref<1x128xf32, #tpu.memory_space<vmem>>, %arg7: memref<128x128xf32, #tpu.memory_space<vmem>>, %arg8: memref<128x128xf32, #tpu.memory_space<vmem>>) attributes {dimension_semantics = [#tpu.dimension_semantics<parallel>, #tpu.dimension_semantics<arbitrary>], iteration_bounds = array<i64: 2, 2>, scalar_prefetch = 0 : i64, scratch_operands = 1 : i64, tpu.core_type = #tpu.core_type<tc>, window_params = [{transform_indices = @transform_0, window_bounds = array<i64: 128, 128>}, {transform_indices = @transform_1, window_bounds = array<i64: 128, 128>}, {transform_indices = @transform_2, window_bounds = array<i64: 128, 128>}, {pipeline_mode = #tpu.pipeline_mode<synchronous>, transform_indices = @transform_3, window_bounds = array<i64: 256, 128>}, {pipeline_mode = #tpu.pipeline_mode<synchronous>, transform_indices = @transform_4, window_bounds = array<i64: 1, 128>}, {transform_indices = @transform_5, window_bounds = array<i64: 128, 128>}]} {
    %c0_i32 = arith.constant 0 : i32
    %0 = arith.cmpi eq, %arg1, %c0_i32 : i32
    %1 = arith.extui %0 : i1 to i32
    %c0_i32_0 = arith.constant 0 : i32
    %2 = arith.cmpi ne, %1, %c0_i32_0 : i32
    scf.if %2 {
      %cst_9 = arith.constant 0.000000e+00 : f32
      %12 = vector.broadcast %cst_9 : f32 to vector<128x128xf32>
      %c0_10 = arith.constant 0 : index
      %c0_11 = arith.constant 0 : index
      %13 = vector.load %arg8[%c0_10, %c0_11] : memref<128x128xf32, #tpu.memory_space<vmem>>, vector<128x128xf32>
      tpu.vector_store %arg8[%c0_10, %c0_11], %12 {strides = array<i32>} : memref<128x128xf32, #tpu.memory_space<vmem>>, vector<128x128xf32>,
    } else {
    }
    %c0 = arith.constant 0 : index
    %c0_1 = arith.constant 0 : index
    %3 = vector.load %arg8[%c0, %c0_1] : memref<128x128xf32, #tpu.memory_space<vmem>>, vector<128x128xf32>
    %c0_2 = arith.constant 0 : index
    %c0_3 = arith.constant 0 : index
    %4 = vector.load %arg2[%c0_2, %c0_3] : memref<128x128xbf16, #tpu.memory_space<vmem>>, vector<128x128xbf16>
    %c0_4 = arith.constant 0 : index
    %c0_5 = arith.constant 0 : index
    %5 = vector.load %arg3[%c0_4, %c0_5] : memref<128x128xbf16, #tpu.memory_space<vmem>>, vector<128x128xbf16>
    %cst = arith.constant dense<0.000000e+00> : vector<128x128xf32>
    %6 = tpu.matmul %4, %5, %cst {dimension_numbers = #tpu.dot_dimension_numbers<[1], [0], [0], [1], [0, 0, 1, 1], [], []>} : vector<128x128xbf16>, vector<128x128xbf16>, vector<128x128xf32> -> vector<128x128xf32>
    %7 = arith.addf %3, %6 : vector<128x128xf32>
    %c0_6 = arith.constant 0 : index
    %c0_7 = arith.constant 0 : index
    %8 = vector.load %arg8[%c0_6, %c0_7] : memref<128x128xf32, #tpu.memory_space<vmem>>, vector<128x128xf32>
    tpu.vector_store %arg8[%c0_6, %c0_7], %7 {strides = array<i32>} : memref<128x128xf32, #tpu.memory_space<vmem>>, vector<128x128xf32>,
    %c1_i32 = arith.constant 1 : i32
    %9 = arith.cmpi eq, %arg1, %c1_i32 : i32
    %10 = arith.extui %9 : i1 to i32
    %c0_i32_8 = arith.constant 0 : i32
    %11 = arith.cmpi ne, %10, %c0_i32_8 : i32
    scf.if %11 {
      %c0_9 = arith.constant 0 : index
      %c0_10 = arith.constant 0 : index
      %12 = vector.load %arg8[%c0_9, %c0_10] : memref<128x128xf32, #tpu.memory_space<vmem>>, vector<128x128xf32>
      %13 = vector.extract_strided_slice %12 {offsets = [0, 32], sizes = [128, 1], strides = [1, 1]} : vector<128x128xf32> to vector<128x1xf32>
      %cst_11 = arith.constant 1.000000e+00 : f32
      %14 = vector.broadcast %cst_11 : f32 to vector<128x1xf32>
      %15 = arith.maximumf %13, %14 : vector<128x1xf32>
      %16 = tpu.reciprocal %15 {approx = true} : vector<128x1xf32> -> vector<128x1xf32>
      %17 = vector.broadcast %16 : vector<128x1xf32> to vector<128x128xf32>
      %18 = arith.mulf %12, %17 : vector<128x128xf32>
      %c0_12 = arith.constant 0 : index
      %c0_13 = arith.constant 0 : index
      %19 = vector.load %arg4[%c0_12, %c0_13] : memref<128x128xbf16, #tpu.memory_space<vmem>>, vector<128x128xbf16>
      %20 = arith.truncf %18 : vector<128x128xf32> to vector<128x128xbf16>
      %21 = tpu.concatenate %19, %20 in 1 : vector<128x128xbf16>, vector<128x128xbf16> -> vector<128x256xbf16>
      %c0_14 = arith.constant 0 : index
      %c0_15 = arith.constant 0 : index
      %22 = vector.load %arg5[%c0_14, %c0_15] : memref<256x128xbf16, #tpu.memory_space<vmem>>, vector<256x128xbf16>
      %cst_16 = arith.constant dense<0.000000e+00> : vector<128x128xf32>
      %23 = tpu.matmul %21, %22, %cst_16 {dimension_numbers = #tpu.dot_dimension_numbers<[1], [0], [0], [1], [0, 0, 1, 1], [], []>} : vector<128x256xbf16>, vector<256x128xbf16>, vector<128x128xf32> -> vector<128x128xf32>
      %c0_17 = arith.constant 0 : index
      %c0_18 = arith.constant 0 : index
      %24 = vector.load %arg6[%c0_17, %c0_18] : memref<1x128xf32, #tpu.memory_space<vmem>>, vector<1x128xf32>
      %25 = vector.broadcast %24 : vector<1x128xf32> to vector<128x128xf32>
      %26 = arith.addf %23, %25 : vector<128x128xf32>
      %cst_19 = arith.constant 0.000000e+00 : f32
      %27 = vector.broadcast %cst_19 : f32 to vector<128x128xf32>
      %28 = arith.cmpf ogt, %26, %27 : vector<128x128xf32>
      %cst_20 = arith.constant 0.00999999977 : f32
      %29 = vector.broadcast %cst_20 : f32 to vector<128x128xf32>
      %30 = arith.mulf %29, %26 : vector<128x128xf32>
      %31 = arith.select %28, %26, %30 : vector<128x128xi1>, vector<128x128xf32>
      %32 = arith.mulf %31, %31 : vector<128x128xf32>
      %cst_21 = arith.constant dense<0.000000e+00> : vector<128xf32>
      %33 = vector.multi_reduction <add>, %32, %cst_21 [1] : vector<128x128xf32> to vector<128xf32>
      %34 = vector.shape_cast %33 : vector<128xf32> to vector<128x1xf32>
      %cst_22 = arith.constant 1.000000e-24 : f32
      %35 = vector.broadcast %cst_22 : f32 to vector<128x1xf32>
      %36 = arith.maximumf %34, %35 : vector<128x1xf32>
      %37 = math.rsqrt %36 : vector<128x1xf32>
      %38 = vector.broadcast %37 : vector<128x1xf32> to vector<128x128xf32>
      %39 = arith.mulf %31, %38 : vector<128x128xf32>
      %c0_23 = arith.constant 0 : index
      %c0_24 = arith.constant 0 : index
      %40 = vector.load %arg7[%c0_23, %c0_24] : memref<128x128xf32, #tpu.memory_space<vmem>>, vector<128x128xf32>
      tpu.vector_store %arg7[%c0_23, %c0_24], %39 {strides = array<i32>} : memref<128x128xf32, #tpu.memory_space<vmem>>, vector<128x128xf32>,
    } else {
    }
    return
  }
  func.func @transform_0(%arg0: i32, %arg1: i32) -> (i32, i32) {
    %c0_i32 = arith.constant 0 : i32
    return %arg0, %arg1 : i32, i32
  }
  func.func @transform_1(%arg0: i32, %arg1: i32) -> (i32, i32) {
    %c0_i32 = arith.constant 0 : i32
    %c0_i32_0 = arith.constant 0 : i32
    return %arg1, %c0_i32 : i32, i32
  }
  func.func @transform_2(%arg0: i32, %arg1: i32) -> (i32, i32) {
    %c0_i32 = arith.constant 0 : i32
    %c0_i32_0 = arith.constant 0 : i32
    return %arg0, %c0_i32 : i32, i32
  }
  func.func @transform_3(%arg0: i32, %arg1: i32) -> (i32, i32) {
    %c0_i32 = arith.constant 0 : i32
    %c0_i32_0 = arith.constant 0 : i32
    %c0_i32_1 = arith.constant 0 : i32
    return %c0_i32, %c0_i32_0 : i32, i32
  }
  func.func @transform_4(%arg0: i32, %arg1: i32) -> (i32, i32) {
    %c0_i32 = arith.constant 0 : i32
    %c0_i32_0 = arith.constant 0 : i32
    %c0_i32_1 = arith.constant 0 : i32
    return %c0_i32, %c0_i32_0 : i32, i32
  }
  func.func @transform_5(%arg0: i32, %arg1: i32) -> (i32, i32) {
    %c0_i32 = arith.constant 0 : i32
    %c0_i32_0 = arith.constant 0 : i32
    return %arg0, %c0_i32 : i32, i32
  }
}

</mosaic_0001>

<llo_original>
// kernel: tpu_custom_call.1
$region0: #{tpu_custom_call.1}
  #allocation0 [shape = 'u32[]', space=smem, size = 0x4, offset = 0x4, fixed_abs, tag = 'smem constant byte address 0x4 - core index']
  #allocation1 [shape = 'u32[144,128]{1,0:T(1,128)}', space=vmem, size = 0x12000, scoped, tag = 'internal scratch']
  #allocation2 [shape = 'f32[128,128]{1,0:T(8,128)}', space=vmem, size = 0x10000, scoped, tag = 'scratch operand']
  %s0 = inlined_call_operand.hbm [shape: bf16[256,256], index: 0, kind: input, shape index: {}]
  %s1 = inlined_call_operand.hbm [shape: bf16[256,128], index: 1, kind: input, shape index: {}]
  %s2 = inlined_call_operand.hbm [shape: bf16[256,128], index: 2, kind: input, shape index: {}]
  %s3 = inlined_call_operand.hbm [shape: bf16[256,128], index: 3, kind: input, shape index: {}]
  %s4 = inlined_call_operand.vmem [shape: f32[1,128], index: 4, kind: input, shape index: {}]
  %s5 = inlined_call_operand.hbm [shape: f32[256,128], index: 5, kind: output, shape index: {}]
  %s6 = sld [smem:[#allocation0]]
  $region77: #{tpu_custom_call.1} parent=0
    _
  %s8 = ssub.s32 1, %s6
  %s9 = scalar_select 0, %s8, %s6
  $region1: #{tpu_custom_call.1} parent=0
    #allocation3 [shape = 'u8[65536]{0}', space=vmem, size = 0x10000, scoped, tag = 'input window, operand 0']
    #allocation4 [shape = 's32[2]{0}', space=sflag, size = 0x8, scoped, tag = 'scoped memory for tpu_custom_call.1']
    #allocation5 [shape = 's32[2]{0}', space=sflag, size = 0x8, scoped, tag = 'scoped memory for tpu_custom_call.1']
    #allocation6 [shape = 'u8[65536]{0}', space=vmem, size = 0x10000, scoped, tag = 'input window, operand 1']
    #allocation7 [shape = 's32[2]{0}', space=sflag, size = 0x8, scoped, tag = 'scoped memory for tpu_custom_call.1']
    #allocation8 [shape = 'u8[65536]{0}', space=vmem, size = 0x10000, scoped, tag = 'input window, operand 2']
    #allocation9 [shape = 'u8[65536]{0}', space=vmem, size = 0x10000, scoped, tag = 'input window, operand 3, single buffered']
    #allocation10 [shape = 's32[1]{0}', space=sflag, size = 0x4, scoped, tag = 'scoped memory for tpu_custom_call.1']
    #allocation11 [shape = 'u8[131072]{0}', space=vmem, size = 0x20000, scoped, tag = 'output window, operand 0']
    %10 = vsyncpa [#allocation4], 0
    %s11 = scalar_lea.sflag [#allocation4], 1
    %12 = vsyncpa %s11, 0
    %13 = vsyncpa [#allocation7], 0
    %s14 = scalar_lea.sflag [#allocation7], 1
    %15 = vsyncpa %s14, 0
    %16 = vsyncpa [#allocation10], 0
    %17 = vsyncpa [#allocation5], 0
    %s18 = scalar_lea.sflag [#allocation5], 1
    %19 = vsyncpa %s18, 0
    loop: start=0, step=1, limit=6
    $region2: #{tpu_custom_call.1} parent=1 // loop_pre_header
      _
    $region3: #{tpu_custom_call.1} parent=1 // loop_header
      %s21 = sphi 0, %s25
      %p22 = scmp.ge.s32.totalorder %s21, 6
      %s28 = sphi 0, %s40
      %s29 = sphi 0, %s36
      %s30 = sphi 0, %s28
      %s31 = sphi 0, %s29
      %s32 = sphi 0, %s30
      %s33 = sphi 0, %s31
      %s45 = sphi 0, %s47
      %s48 = sphi 0, %s45
      %s49 = sphi 0, %s48
      %s65 = sphi 0, %s49
      %s71 = sphi 0, %s73
      %s74 = sphi 0, %s71
      %s75 = sphi 0, %s74
      %s91 = sphi 0, %s75
      %s97 = sphi 0, %s99
      %s100 = sphi 0, %s97
      %s101 = sphi 0, %s100
      %s117 = sphi 0, %s101
      %s121 = sphi 0, %s121
      %s123 = sphi 0, %s121
      %s124 = sphi 0, %s123
      %s138 = sphi 0, %s124
      %s142 = sphi 0, %s142
      %s144 = sphi 0, %s142
      %s145 = sphi 0, %s144
      %s159 = sphi 0, %s145
      %s165 = sphi 0, %s167
      %s168 = sphi 0, %s165
      %s169 = sphi 0, %s168
      %s185 = sphi 0, %s169
    $region4: #{tpu_custom_call.1} parent=1 // loop_header_branch
      %24 = sbr.rel (%p22) target = $region8
    $region5: #{tpu_custom_call.1} parent=1 // loop_body
      %s26 = ssub.s32 %s21, 1
      %s27 = ssub.s32 %s21, 2
      %s34 = sadd.s32 1, %s29
      %p35 = scmp.ge.s32.totalorder %s34, 2
      %s36 = scalar_select %p35, 0, %s34
      %s37 = sadd.s32 1, %s28
      %s38 = scalar_select %p35, %s37, %s28
      %p39 = scmp.ge.s32.totalorder %s38, 2
      %s40 = scalar_select %p39, 0, %s38
      %s41 = ssub.s32 %s28, %s40
      %s42 = ssub.s32 %s29, %s36
      %s43 = sor.u32 %s41, %s42
      %p44 = scmp.eq.s32.totalorder %s43, 0
      %s46 = sadd.s32 %s45, 1
      %s47 = scalar_select %p44, %s45, %s46
      %p50 = pneg %p44
      %p51 = scmp.eq.s32.totalorder %s21, 3
      %p52 = por %p50, %p51
      %p53 = scmp.ne.s32.totalorder %s45, %s48
      %p54 = scmp.eq.s32.totalorder %s21, 0
      %p55 = por %p53, %p54
      %p56 = scmp.ne.s32.totalorder %s45, %s48
      %p57 = scmp.eq.s32.totalorder %s26, 3
      %p58 = por %p56, %p57
      %p59 = scmp.ne.s32.totalorder %s48, %s49
      %p60 = scmp.eq.s32.totalorder %s26, 0
      %p61 = por %p59, %p60
      %p62 = scmp.ne.s32.totalorder %s48, %s49
      %p63 = scmp.eq.s32.totalorder %s27, 3
      %p64 = por %p62, %p63
      %p66 = scmp.ne.s32.totalorder %s49, %s65
      %p67 = scmp.eq.s32.totalorder %s27, 0
      %p68 = por %p66, %p67
      %s69 = ssub.s32 %s29, %s36
      %p70 = scmp.eq.s32.totalorder %s69, 0
      %s72 = sadd.s32 %s71, 1
      %s73 = scalar_select %p70, %s71, %s72
      %p76 = pneg %p70
      %p77 = scmp.eq.s32.totalorder %s21, 3
      %p78 = por %p76, %p77
      %p79 = scmp.ne.s32.totalorder %s71, %s74
      %p80 = scmp.eq.s32.totalorder %s21, 0
      %p81 = por %p79, %p80
      %p82 = scmp.ne.s32.totalorder %s71, %s74
      %p83 = scmp.eq.s32.totalorder %s26, 3
      %p84 = por %p82, %p83
      %p85 = scmp.ne.s32.totalorder %s74, %s75
      %p86 = scmp.eq.s32.totalorder %s26, 0
      %p87 = por %p85, %p86
      %p88 = scmp.ne.s32.totalorder %s74, %s75
      %p89 = scmp.eq.s32.totalorder %s27, 3
      %p90 = por %p88, %p89
      %p92 = scmp.ne.s32.totalorder %s75, %s91
      %p93 = scmp.eq.s32.totalorder %s27, 0
      %p94 = por %p92, %p93
      %s95 = ssub.s32 %s28, %s40
      %p96 = scmp.eq.s32.totalorder %s95, 0
      %s98 = sadd.s32 %s97, 1
      %s99 = scalar_select %p96, %s97, %s98
      %p102 = pneg %p96
      %p103 = scmp.eq.s32.totalorder %s21, 3
      %p104 = por %p102, %p103
      %p105 = scmp.ne.s32.totalorder %s97, %s100
      %p106 = scmp.eq.s32.totalorder %s21, 0
      %p107 = por %p105, %p106
      %p108 = scmp.ne.s32.totalorder %s97, %s100
      %p109 = scmp.eq.s32.totalorder %s26, 3
      %p110 = por %p108, %p109
      %p111 = scmp.ne.s32.totalorder %s100, %s101
      %p112 = scmp.eq.s32.totalorder %s26, 0
      %p113 = por %p111, %p112
      %p114 = scmp.ne.s32.totalorder %s100, %s101
      %p115 = scmp.eq.s32.totalorder %s27, 3
      %p116 = por %p114, %p115
      %p118 = scmp.ne.s32.totalorder %s101, %s117
      %p119 = scmp.eq.s32.totalorder %s27, 0
      %p120 = por %p118, %p119
      %s122 = sadd.s32 %s121, 1
      %p125 = scmp.eq.s32.totalorder %s21, 3
      %p126 = scmp.ne.s32.totalorder %s121, %s123
      %p127 = scmp.eq.s32.totalorder %s21, 0
      %p128 = por %p126, %p127
      %p129 = scmp.ne.s32.totalorder %s121, %s123
      %p130 = scmp.eq.s32.totalorder %s26, 3
      %p131 = por %p129, %p130
      %p132 = scmp.ne.s32.totalorder %s123, %s124
      %p133 = scmp.eq.s32.totalorder %s26, 0
      %p134 = por %p132, %p133
      %p135 = scmp.ne.s32.totalorder %s123, %s124
      %p136 = scmp.eq.s32.totalorder %s27, 3
      %p137 = por %p135, %p136
      %p139 = scmp.ne.s32.totalorder %s124, %s138
      %p140 = scmp.eq.s32.totalorder %s27, 0
      %p141 = por %p139, %p140
      %s143 = sadd.s32 %s142, 1
      %p146 = scmp.eq.s32.totalorder %s21, 3
      %p147 = scmp.ne.s32.totalorder %s142, %s144
      %p148 = scmp.eq.s32.totalorder %s21, 0
      %p149 = por %p147, %p148
      %p150 = scmp.ne.s32.totalorder %s142, %s144
      %p151 = scmp.eq.s32.totalorder %s26, 3
      %p152 = por %p150, %p151
      %p153 = scmp.ne.s32.totalorder %s144, %s145
      %p154 = scmp.eq.s32.totalorder %s26, 0
      %p155 = por %p153, %p154
      %p156 = scmp.ne.s32.totalorder %s144, %s145
      %p157 = scmp.eq.s32.totalorder %s27, 3
      %p158 = por %p156, %p157
      %p160 = scmp.ne.s32.totalorder %s145, %s159
      %p161 = scmp.eq.s32.totalorder %s27, 0
      %p162 = por %p160, %p161
      %s163 = ssub.s32 %s28, %s40
      %p164 = scmp.eq.s32.totalorder %s163, 0
      %s166 = sadd.s32 %s165, 1
      %s167 = scalar_select %p164, %s165, %s166
      %p170 = pneg %p164
      %p171 = scmp.eq.s32.totalorder %s21, 3
      %p172 = por %p170, %p171
      %p173 = scmp.ne.s32.totalorder %s165, %s168
      %p174 = scmp.eq.s32.totalorder %s21, 0
      %p175 = por %p173, %p174
      %p176 = scmp.ne.s32.totalorder %s165, %s168
      %p177 = scmp.eq.s32.totalorder %s26, 3
      %p178 = por %p176, %p177
      %p179 = scmp.ne.s32.totalorder %s168, %s169
      %p180 = scmp.eq.s32.totalorder %s26, 0
      %p181 = por %p179, %p180
      %p182 = scmp.ne.s32.totalorder %s168, %s169
      %p183 = scmp.eq.s32.totalorder %s27, 3
      %p184 = por %p182, %p183
      %p186 = scmp.ne.s32.totalorder %s169, %s185
      %p187 = scmp.eq.s32.totalorder %s27, 0
      %p188 = por %p186, %p187
      %p189 = scmp.le.s32.totalorder 1, %s21
      %p190 = scmp.lt.s32.totalorder %s21, 5
      %p191 = pnand %p189, %p190
      %p192 = pneg %p191
      // Predicated region
      $region9: #{tpu_custom_call.1} parent=5 // pred_check
        _
      $region10: #{tpu_custom_call.1} parent=5 // pred_check_branch
        %194 = sbr.rel (%p191) target = $region12
      $region11: #{tpu_custom_call.1} parent=5 // pred_region
        %s195 = ssub.s32 %s21, 1
        // Predicated region
        $region13: #{tpu_custom_call.1} parent=11 // pred_check
          %p196 = pneg %p134
        $region14: #{tpu_custom_call.1} parent=11 // pred_check_branch
          %198 = sbr.rel (%p196) target = $region16
        $region15: #{tpu_custom_call.1} parent=11 // pred_region
          %s200 = ssub.s32 2048, 2048
          %201 = vsyncadd [#allocation10], %s200
          %s202 = sshll.u32 [#allocation9], 4
          %s203 = int_to_ptr.vmem [resolvable:$true] %s202
          %208 = dma.hbm_to_vmem [thread:$0]  %s3, 2048, %s203, [#allocation10], 64, 64, 4
        $region16: #{tpu_custom_call.1} parent=11 // pred_fallthru
          _
        // Predicated region
        $region17: #{tpu_custom_call.1} parent=11 // pred_check
          %p209 = pneg %p155
        $region18: #{tpu_custom_call.1} parent=11 // pred_check_branch
          %211 = sbr.rel (%p209) target = $region20
        $region19: #{tpu_custom_call.1} parent=11 // pred_region
          _
        $region20: #{tpu_custom_call.1} parent=11 // pred_fallthru
          _
      $region12: #{tpu_custom_call.1} parent=5 // pred_fallthru
        _
      %p212 = scmp.lt.s32.totalorder %s21, 4
      // Predicated region
      $region21: #{tpu_custom_call.1} parent=5 // pred_check
        %p213 = pneg %p212
      $region22: #{tpu_custom_call.1} parent=5 // pred_check_branch
        %215 = sbr.rel (%p213) target = $region24
      $region23: #{tpu_custom_call.1} parent=5 // pred_region
        // Predicated region
        $region25: #{tpu_custom_call.1} parent=23 // pred_check
          %p216 = pneg %p55
        $region26: #{tpu_custom_call.1} parent=23 // pred_check_branch
          %218 = sbr.rel (%p216) target = $region28
        $region27: #{tpu_custom_call.1} parent=23 // pred_region
          %s219 = sand.u32 %s45, 1
          %s220 = scalar_lea.sflag [#allocation4], %s219
          %s221 = sand.u32 %s45, 1
          %s222 = smul.addr %s221, 64
          %s223 = scalar_lea.vmem [#allocation3], %s222
          %s224 = smul.u32 16, %s28
          %s226 = ssub.s32 1024, 1024
          %227 = vsyncadd %s220, %s226
          %s228 = smul.addr %s224, 2
          %s229 = sadd.s32 %s29, %s228
          %s230 = smul.addr %s229, 64
          %s231 = scalar_lea.hbm %s0, %s230
          %s232 = sshll.u32 %s223, 4
          %s233 = int_to_ptr.vmem [resolvable:$true] %s232
          %238 = dma.hbm_to_vmem [thread:$0]  %s231, 1024, %s233, %s220, 128, 64, 4
        $region28: #{tpu_custom_call.1} parent=23 // pred_fallthru
          _
        // Predicated region
        $region29: #{tpu_custom_call.1} parent=23 // pred_check
          %p239 = pneg %p81
        $region30: #{tpu_custom_call.1} parent=23 // pred_check_branch
          %241 = sbr.rel (%p239) target = $region32
        $region31: #{tpu_custom_call.1} parent=23 // pred_region
          %s242 = sand.u32 %s21, 1
          %s243 = scalar_lea.sflag [#allocation7], %s242
          %s244 = sand.u32 %s71, 1
          %s245 = smul.addr %s244, 64
          %s246 = scalar_lea.vmem [#allocation6], %s245
          %s247 = smul.u32 16, %s29
          %s249 = ssub.s32 1024, 1024
          %250 = vsyncadd %s243, %s249
          %s251 = smul.addr %s247, 64
          %s252 = scalar_lea.hbm %s1, %s251
          %s253 = sshll.u32 %s246, 4
          %s254 = int_to_ptr.vmem [resolvable:$true] %s253
          %259 = dma.hbm_to_vmem [thread:$0]  %s252, 1024, %s254, %s243, 64, 64, 4
        $region32: #{tpu_custom_call.1} parent=23 // pred_fallthru
          _
        // Predicated region
        $region33: #{tpu_custom_call.1} parent=23 // pred_check
          %p260 = pneg %p107
        $region34: #{tpu_custom_call.1} parent=23 // pred_check_branch
          %262 = sbr.rel (%p260) target = $region36
        $region35: #{tpu_custom_call.1} parent=23 // pred_region
          %s263 = sand.u32 %s21, 1
          %s264 = scalar_lea.sflag [#allocation7], %s263
          %s265 = sand.u32 %s97, 1
          %s266 = smul.addr %s265, 64
          %s267 = scalar_lea.vmem [#allocation8], %s266
          %s268 = smul.u32 16, %s28
          %s270 = ssub.s32 1024, 1024
          %271 = vsyncadd %s264, %s270
          %s272 = smul.addr %s268, 64
          %s273 = scalar_lea.hbm %s2, %s272
          %s274 = sshll.u32 %s267, 4
          %s275 = int_to_ptr.vmem [resolvable:$true] %s274
          %280 = dma.hbm_to_vmem [thread:$0]  %s273, 1024, %s275, %s264, 64, 64, 4
        $region36: #{tpu_custom_call.1} parent=23 // pred_fallthru
          _
      $region24: #{tpu_custom_call.1} parent=5 // pred_fallthru
        _
      %p281 = scmp.le.s32.totalorder 1, %s21
      %p282 = scmp.lt.s32.totalorder %s21, 5
      %p283 = pnand %p281, %p282
      %p284 = pneg %p283
      // Predicated region
      $region37: #{tpu_custom_call.1} parent=5 // pred_check
        _
      $region38: #{tpu_custom_call.1} parent=5 // pred_check_branch
        %286 = sbr.rel (%p283) target = $region40
      $region39: #{tpu_custom_call.1} parent=5 // pred_region
        %s287 = ssub.s32 %s21, 1
        %s288 = sand.u32 %s48, 1
        %s289 = scalar_lea.sflag [#allocation4], %s288
        %s290 = sand.u32 %s48, 1
        %s291 = smul.addr %s290, 64
        %s292 = scalar_lea.vmem [#allocation3], %s291
        // Predicated region
        $region41: #{tpu_custom_call.1} parent=39 // pred_check
          %p293 = pneg %p61
        $region42: #{tpu_custom_call.1} parent=39 // pred_check_branch
          %295 = sbr.rel (%p293) target = $region44
        $region43: #{tpu_custom_call.1} parent=39 // pred_region
          %296 = dma.done %s289, 1024
        $region44: #{tpu_custom_call.1} parent=39 // pred_fallthru
          _
        %s297 = sand.u32 %s26, 1
        %s298 = scalar_lea.sflag [#allocation7], %s297
        %s299 = sand.u32 %s74, 1
        %s300 = smul.addr %s299, 64
        %s301 = scalar_lea.vmem [#allocation6], %s300
        // Predicated region
        $region45: #{tpu_custom_call.1} parent=39 // pred_check
          %p302 = pneg %p87
        $region46: #{tpu_custom_call.1} parent=39 // pred_check_branch
          %304 = sbr.rel (%p302) target = $region48
        $region47: #{tpu_custom_call.1} parent=39 // pred_region
          %305 = dma.done %s298, 1024
        $region48: #{tpu_custom_call.1} parent=39 // pred_fallthru
          _
        %s306 = sand.u32 %s26, 1
        %s307 = scalar_lea.sflag [#allocation7], %s306
        %s308 = sand.u32 %s100, 1
        %s309 = smul.addr %s308, 64
        %s310 = scalar_lea.vmem [#allocation8], %s309
        // Predicated region
        $region49: #{tpu_custom_call.1} parent=39 // pred_check
          %p311 = pneg %p113
        $region50: #{tpu_custom_call.1} parent=39 // pred_check_branch
          %313 = sbr.rel (%p311) target = $region52
        $region51: #{tpu_custom_call.1} parent=39 // pred_region
          %314 = dma.done %s307, 1024
        $region52: #{tpu_custom_call.1} parent=39 // pred_fallthru
          _
        // Predicated region
        $region53: #{tpu_custom_call.1} parent=39 // pred_check
          %p315 = pneg %p134
        $region54: #{tpu_custom_call.1} parent=39 // pred_check_branch
          %317 = sbr.rel (%p315) target = $region56
        $region55: #{tpu_custom_call.1} parent=39 // pred_region
          %318 = dma.done [#allocation10], 2048
        $region56: #{tpu_custom_call.1} parent=39 // pred_fallthru
          _
        %s319 = sand.u32 %s48, 1
        %s320 = scalar_lea.sflag [#allocation4], %s319
        %s321 = sand.u32 %s48, 1
        %s322 = smul.addr %s321, 64
        %s323 = scalar_lea.vmem [#allocation3], %s322
        %p324 = pneg %p61
        %p325 = pneg %p58
        %s326 = sand.u32 %s26, 1
        %s327 = scalar_lea.sflag [#allocation7], %s326
        %s328 = sand.u32 %s74, 1
        %s329 = smul.addr %s328, 64
        %s330 = scalar_lea.vmem [#allocation6], %s329
        %p331 = pneg %p87
        %p332 = pneg %p84
        %s333 = sand.u32 %s26, 1
        %s334 = scalar_lea.sflag [#allocation7], %s333
        %s335 = sand.u32 %s100, 1
        %s336 = smul.addr %s335, 64
        %s337 = scalar_lea.vmem [#allocation8], %s336
        %p338 = pneg %p113
        %p339 = pneg %p110
        %p340 = pneg %p134
        %p341 = pneg %p131
        %p342 = pneg %p155
        %p343 = pneg %p152
        %p344 = pneg %p181
        %p345 = pneg %p178
        %s346 = sand.u32 %s168, 1
        %s347 = scalar_lea.sflag [#allocation5], %s346
        %s348 = sand.u32 %s168, 1
        %s349 = smul.addr %s348, 128
        %s350 = scalar_lea.vmem [#allocation11], %s349
        %s351 = smul.u32 16, %s30
        %s352 = smul.u32 16, %s31
        %s353 = smul.u32 16, %s30
        %s354 = smul.u32 16, %s30
        %p356 = scmp.eq.s32.totalorder %s31, 0
        // Predicated region
        $region57: #{tpu_custom_call.1} parent=39 // pred_check
          %p357 = pneg %p356
        $region58: #{tpu_custom_call.1} parent=39 // pred_check_branch
          %359 = sbr.rel (%p357) target = $region60
        $region59: #{tpu_custom_call.1} parent=39 // pred_region
          %360 = vst [vmem:[#allocation2] sm:$0xff] 0.0
          %361 = vst [vmem:[#allocation2 + $0x8] sm:$0xff] 0.0
          %362 = vst [vmem:[#allocation2 + $0x10] sm:$0xff] 0.0
          %363 = vst [vmem:[#allocation2 + $0x18] sm:$0xff] 0.0
          %364 = vst [vmem:[#allocation2 + $0x20] sm:$0xff] 0.0
          %365 = vst [vmem:[#allocation2 + $0x28] sm:$0xff] 0.0
          %366 = vst [vmem:[#allocation2 + $0x30] sm:$0xff] 0.0
          %367 = vst [vmem:[#allocation2 + $0x38] sm:$0xff] 0.0
          %368 = vst [vmem:[#allocation2 + $0x40] sm:$0xff] 0.0
          %369 = vst [vmem:[#allocation2 + $0x48] sm:$0xff] 0.0
          %370 = vst [vmem:[#allocation2 + $0x50] sm:$0xff] 0.0
          %371 = vst [vmem:[#allocation2 + $0x58] sm:$0xff] 0.0
          %372 = vst [vmem:[#allocation2 + $0x60] sm:$0xff] 0.0
          %373 = vst [vmem:[#allocation2 + $0x68] sm:$0xff] 0.0
          %374 = vst [vmem:[#allocation2 + $0x70] sm:$0xff] 0.0
          %375 = vst [vmem:[#allocation2 + $0x78] sm:$0xff] 0.0
        $region60: #{tpu_custom_call.1} parent=39 // pred_fallthru
          _
        %v376 = vld [vmem:[#allocation2] sm:$0xff]
        %v377 = vld [vmem:[#allocation2 + $0x8] sm:$0xff]
        %v378 = vld [vmem:[#allocation2 + $0x10] sm:$0xff]
        %v379 = vld [vmem:[#allocation2 + $0x18] sm:$0xff]
        %v380 = vld [vmem:[#allocation2 + $0x20] sm:$0xff]
        %v381 = vld [vmem:[#allocation2 + $0x28] sm:$0xff]
        %v382 = vld [vmem:[#allocation2 + $0x30] sm:$0xff]
        %v383 = vld [vmem:[#allocation2 + $0x38] sm:$0xff]
        %v384 = vld [vmem:[#allocation2 + $0x40] sm:$0xff]
        %v385 = vld [vmem:[#allocation2 + $0x48] sm:$0xff]
        %v386 = vld [vmem:[#allocation2 + $0x50] sm:$0xff]
        %v387 = vld [vmem:[#allocation2 + $0x58] sm:$0xff]
        %v388 = vld [vmem:[#allocation2 + $0x60] sm:$0xff]
        %v389 = vld [vmem:[#allocation2 + $0x68] sm:$0xff]
        %v390 = vld [vmem:[#allocation2 + $0x70] sm:$0xff]
        %v391 = vld [vmem:[#allocation2 + $0x78] sm:$0xff]
        %v392 = vld [vmem:[%s292] sm:$0xf]
        %v393 = vld [vmem:[%s292 + $0x4] sm:$0xf]
        %v394 = vld [vmem:[%s292 + $0x8] sm:$0xf]
        %v395 = vld [vmem:[%s292 + $0xc] sm:$0xf]
        %v396 = vld [vmem:[%s292 + $0x10] sm:$0xf]
        %v397 = vld [vmem:[%s292 + $0x14] sm:$0xf]
        %v398 = vld [vmem:[%s292 + $0x18] sm:$0xf]
        %v399 = vld [vmem:[%s292 + $0x1c] sm:$0xf]
        %v400 = vld [vmem:[%s292 + $0x20] sm:$0xf]
        %v401 = vld [vmem:[%s292 + $0x24] sm:$0xf]
        %v402 = vld [vmem:[%s292 + $0x28] sm:$0xf]
        %v403 = vld [vmem:[%s292 + $0x2c] sm:$0xf]
        %v404 = vld [vmem:[%s292 + $0x30] sm:$0xf]
        %v405 = vld [vmem:[%s292 + $0x34] sm:$0xf]
        %v406 = vld [vmem:[%s292 + $0x38] sm:$0xf]
        %v407 = vld [vmem:[%s292 + $0x3c] sm:$0xf]
        %v408 = vld [vmem:[%s301] sm:$0xf]
        %v409 = vld [vmem:[%s301 + $0x4] sm:$0xf]
        %v410 = vld [vmem:[%s301 + $0x8] sm:$0xf]
        %v411 = vld [vmem:[%s301 + $0xc] sm:$0xf]
        %v412 = vld [vmem:[%s301 + $0x10] sm:$0xf]
        %v413 = vld [vmem:[%s301 + $0x14] sm:$0xf]
        %v414 = vld [vmem:[%s301 + $0x18] sm:$0xf]
        %v415 = vld [vmem:[%s301 + $0x1c] sm:$0xf]
        %v416 = vld [vmem:[%s301 + $0x20] sm:$0xf]
        %v417 = vld [vmem:[%s301 + $0x24] sm:$0xf]
        %v418 = vld [vmem:[%s301 + $0x28] sm:$0xf]
        %v419 = vld [vmem:[%s301 + $0x2c] sm:$0xf]
        %v420 = vld [vmem:[%s301 + $0x30] sm:$0xf]
        %v421 = vld [vmem:[%s301 + $0x34] sm:$0xf]
        %v422 = vld [vmem:[%s301 + $0x38] sm:$0xf]
        %v423 = vld [vmem:[%s301 + $0x3c] sm:$0xf]
        %v440 = vunpack.c.l.b16 %v392
        %v441 = vunpack.c.l.b16 %v393
        %v442 = vunpack.c.l.b16 %v394
        %v443 = vunpack.c.l.b16 %v395
        %v444 = vunpack.c.l.b16 %v396
        %v445 = vunpack.c.l.b16 %v397
        %v446 = vunpack.c.l.b16 %v398
        %v447 = vunpack.c.l.b16 %v399
        %v448 = vunpack.c.l.b16 %v400
        %v449 = vunpack.c.l.b16 %v401
        %v450 = vunpack.c.l.b16 %v402
        %v451 = vunpack.c.l.b16 %v403
        %v452 = vunpack.c.l.b16 %v404
        %v453 = vunpack.c.l.b16 %v405
        %v454 = vunpack.c.l.b16 %v406
        %v455 = vunpack.c.l.b16 %v407
        %v456 = vpack.c.b16 %v441, %v440
        %v457 = vpack.c.b16 %v443, %v442
        %v458 = vpack.c.b16 %v445, %v444
        %v459 = vpack.c.b16 %v447, %v446
        %v460 = vpack.c.b16 %v449, %v448
        %v461 = vpack.c.b16 %v451, %v450
        %v462 = vpack.c.b16 %v453, %v452
        %v463 = vpack.c.b16 %v455, %v454
        %v488 = vunpack.c.l.b16 %v408
        %v489 = vunpack.c.l.b16 %v409
        %v490 = vunpack.c.l.b16 %v410
        %v491 = vunpack.c.l.b16 %v411
        %v492 = vunpack.c.l.b16 %v412
        %v493 = vunpack.c.l.b16 %v413
        %v494 = vunpack.c.l.b16 %v414
        %v495 = vunpack.c.l.b16 %v415
        %v496 = vunpack.c.l.b16 %v416
        %v497 = vunpack.c.l.b16 %v417
        %v498 = vunpack.c.l.b16 %v418
        %v499 = vunpack.c.l.b16 %v419
        %v500 = vunpack.c.l.b16 %v420
        %v501 = vunpack.c.l.b16 %v421
        %v502 = vunpack.c.l.b16 %v422
        %v503 = vunpack.c.l.b16 %v423
        %v504 = vpack.c.b16 %v489, %v488
        %v505 = vpack.c.b16 %v491, %v490
        %v506 = vpack.c.b16 %v493, %v492
        %v507 = vpack.c.b16 %v495, %v494
        %v508 = vpack.c.b16 %v497, %v496
        %v509 = vpack.c.b16 %v499, %v498
        %v510 = vpack.c.b16 %v501, %v500
        %v511 = vpack.c.b16 %v503, %v502
        %520 = vmatprep.subr.bf16.mxu0 0
        %521 = vmatpush1.bf16.msra.mxu0 %v504
        %522 = vmatprep.subr.bf16.mxu0 0
        %523 = vmatpush1.bf16.msra.mxu0 %v505
        %524 = vmatprep.subr.bf16.mxu0 0
        %525 = vmatpush1.bf16.msra.mxu0 %v506
        %526 = vmatprep.subr.bf16.mxu0 0
        %527 = vmatpush1.bf16.msra.mxu0 %v507
        %528 = vmatprep.subr.bf16.mxu0 0
        %529 = vmatpush1.bf16.msra.mxu0 %v508
        %530 = vmatprep.subr.bf16.mxu0 0
        %531 = vmatpush1.bf16.msra.mxu0 %v509
        %532 = vmatprep.subr.bf16.mxu0 0
        %533 = vmatpush1.bf16.msra.mxu0 %v510
        %534 = vmatprep.subr.bf16.mxu0 0
        %535 = vmatpush1.bf16.msra.mxu0 %v511
        %536 = vmatprep.subr.bf16.mxu0 0
        %537 = vmatpush1.bf16.msra.mxu0 0
        %538 = vmatprep.subr.bf16.mxu0 0
        %539 = vmatpush1.bf16.msra.mxu0 0
        %540 = vmatprep.subr.bf16.mxu0 0
        %541 = vmatpush1.bf16.msra.mxu0 0
        %542 = vmatprep.subr.bf16.mxu0 0
        %543 = vmatpush1.bf16.msra.mxu0 0
        %544 = vmatprep.subr.bf16.mxu0 0
        %545 = vmatpush1.bf16.msra.mxu0 0
        %546 = vmatprep.subr.bf16.mxu0 0
        %547 = vmatpush1.bf16.msra.mxu0 0
        %548 = vmatprep.subr.bf16.mxu0 0
        %549 = vmatpush1.bf16.msra.mxu0 0
        %550 = vmatprep.subr.bf16.mxu0 0
        %551 = vmatpush1.bf16.msra.mxu0 0
        %552 = vmatprep.mubr.bf16.mxu0 0
        %553 = vmatmul.mubr.bf16.gmra.mrb[0].mxu0 %v456
        %v554 = vpop.f32.mrb[0].mxu0
        %v555 = vadd.f32 0.0, %v554
        %v556 = vpop.f32.mrb[0].mxu0
        %v557 = vpop.f32.mrb[0].mxu0
        %v558 = vadd.f32 0.0, %v557
        %v559 = vpop.f32.mrb[0].mxu0
        %560 = vmatprep.mubr.bf16.mxu0 0
        %561 = vmatmul.mubr.bf16.gmra.mrb[0].mxu0 %v457
        %v562 = vpop.f32.mrb[0].mxu0
        %v563 = vadd.f32 0.0, %v562
        %v564 = vpop.f32.mrb[0].mxu0
        %v565 = vpop.f32.mrb[0].mxu0
        %v566 = vadd.f32 0.0, %v565
        %v567 = vpop.f32.mrb[0].mxu0
        %568 = vmatprep.mubr.bf16.mxu0 0
        %569 = vmatmul.mubr.bf16.gmra.mrb[0].mxu0 %v458
        %v570 = vpop.f32.mrb[0].mxu0
        %v571 = vadd.f32 0.0, %v570
        %v572 = vpop.f32.mrb[0].mxu0
        %v573 = vpop.f32.mrb[0].mxu0
        %v574 = vadd.f32 0.0, %v573
        %v575 = vpop.f32.mrb[0].mxu0
        %576 = vmatprep.mubr.bf16.mxu0 0
        %577 = vmatmul.mubr.bf16.gmra.mrb[0].mxu0 %v459
        %v578 = vpop.f32.mrb[0].mxu0
        %v579 = vadd.f32 0.0, %v578
        %v580 = vpop.f32.mrb[0].mxu0
        %v581 = vpop.f32.mrb[0].mxu0
        %v582 = vadd.f32 0.0, %v581
        %v583 = vpop.f32.mrb[0].mxu0
        %584 = vmatprep.mubr.bf16.mxu0 0
        %585 = vmatmul.mubr.bf16.gmra.mrb[0].mxu0 %v460
        %v586 = vpop.f32.mrb[0].mxu0
        %v587 = vadd.f32 0.0, %v586
        %v588 = vpop.f32.mrb[0].mxu0
        %v589 = vpop.f32.mrb[0].mxu0
        %v590 = vadd.f32 0.0, %v589
        %v591 = vpop.f32.mrb[0].mxu0
        %592 = vmatprep.mubr.bf16.mxu0 0
        %593 = vmatmul.mubr.bf16.gmra.mrb[0].mxu0 %v461
        %v594 = vpop.f32.mrb[0].mxu0
        %v595 = vadd.f32 0.0, %v594
        %v596 = vpop.f32.mrb[0].mxu0
        %v597 = vpop.f32.mrb[0].mxu0
        %v598 = vadd.f32 0.0, %v597
        %v599 = vpop.f32.mrb[0].mxu0
        %600 = vmatprep.mubr.bf16.mxu0 0
        %601 = vmatmul.mubr.bf16.gmra.mrb[0].mxu0 %v462
        %v602 = vpop.f32.mrb[0].mxu0
        %v603 = vadd.f32 0.0, %v602
        %v604 = vpop.f32.mrb[0].mxu0
        %v605 = vpop.f32.mrb[0].mxu0
        %v606 = vadd.f32 0.0, %v605
        %v607 = vpop.f32.mrb[0].mxu0
        %608 = vmatprep.mubr.bf16.mxu0 0
        %609 = vmatmul.mubr.bf16.gmra.mrb[0].mxu0 %v463
        %v610 = vpop.f32.mrb[0].mxu0
        %v611 = vadd.f32 0.0, %v610
        %v612 = vpop.f32.mrb[0].mxu0
        %v613 = vpop.f32.mrb[0].mxu0
        %v614 = vadd.f32 0.0, %v613
        %v615 = vpop.f32.mrb[0].mxu0
        %616 = vdwg.mxu0
        %v617 = vadd.f32 %v376, %v555
        %v618 = vadd.f32 %v377, %v558
        %v619 = vadd.f32 %v378, %v563
        %v620 = vadd.f32 %v379, %v566
        %v621 = vadd.f32 %v380, %v571
        %v622 = vadd.f32 %v381, %v574
        %v623 = vadd.f32 %v382, %v579
        %v624 = vadd.f32 %v383, %v582
        %v625 = vadd.f32 %v384, %v587
        %v626 = vadd.f32 %v385, %v590
        %v627 = vadd.f32 %v386, %v595
        %v628 = vadd.f32 %v387, %v598
        %v629 = vadd.f32 %v388, %v603
        %v630 = vadd.f32 %v389, %v606
        %v631 = vadd.f32 %v390, %v611
        %v632 = vadd.f32 %v391, %v614
        %633 = vst [vmem:[#allocation2] sm:$0xff] %v617
        %634 = vst [vmem:[#allocation2 + $0x8] sm:$0xff] %v618
        %635 = vst [vmem:[#allocation2 + $0x10] sm:$0xff] %v619
        %636 = vst [vmem:[#allocation2 + $0x18] sm:$0xff] %v620
        %637 = vst [vmem:[#allocation2 + $0x20] sm:$0xff] %v621
        %638 = vst [vmem:[#allocation2 + $0x28] sm:$0xff] %v622
        %639 = vst [vmem:[#allocation2 + $0x30] sm:$0xff] %v623
        %640 = vst [vmem:[#allocation2 + $0x38] sm:$0xff] %v624
        %641 = vst [vmem:[#allocation2 + $0x40] sm:$0xff] %v625
        %642 = vst [vmem:[#allocation2 + $0x48] sm:$0xff] %v626
        %643 = vst [vmem:[#allocation2 + $0x50] sm:$0xff] %v627
        %644 = vst [vmem:[#allocation2 + $0x58] sm:$0xff] %v628
        %645 = vst [vmem:[#allocation2 + $0x60] sm:$0xff] %v629
        %646 = vst [vmem:[#allocation2 + $0x68] sm:$0xff] %v630
        %647 = vst [vmem:[#allocation2 + $0x70] sm:$0xff] %v631
        %648 = vst [vmem:[#allocation2 + $0x78] sm:$0xff] %v632
        %p649 = scmp.eq.s32.totalorder %s31, 1
        // Predicated region
        $region61: #{tpu_custom_call.1} parent=39 // pred_check
          %p650 = pneg %p649
        $region62: #{tpu_custom_call.1} parent=39 // pred_check_branch
          %652 = sbr.rel (%p650) target = $region64
        $region63: #{tpu_custom_call.1} parent=39 // pred_region
          %v653 = vld [vmem:[#allocation2] sm:$0xff]
          %v654 = vld [vmem:[#allocation2 + $0x8] sm:$0xff]
          %v655 = vld [vmem:[#allocation2 + $0x10] sm:$0xff]
          %v656 = vld [vmem:[#allocation2 + $0x18] sm:$0xff]
          %v657 = vld [vmem:[#allocation2 + $0x20] sm:$0xff]
          %v658 = vld [vmem:[#allocation2 + $0x28] sm:$0xff]
          %v659 = vld [vmem:[#allocation2 + $0x30] sm:$0xff]
          %v660 = vld [vmem:[#allocation2 + $0x38] sm:$0xff]
          %v661 = vld [vmem:[#allocation2 + $0x40] sm:$0xff]
          %v662 = vld [vmem:[#allocation2 + $0x48] sm:$0xff]
          %v663 = vld [vmem:[#allocation2 + $0x50] sm:$0xff]
          %v664 = vld [vmem:[#allocation2 + $0x58] sm:$0xff]
          %v665 = vld [vmem:[#allocation2 + $0x60] sm:$0xff]
          %v666 = vld [vmem:[#allocation2 + $0x68] sm:$0xff]
          %v667 = vld [vmem:[#allocation2 + $0x70] sm:$0xff]
          %v668 = vld [vmem:[#allocation2 + $0x78] sm:$0xff]
          %v669 = vmax.f32 %v653, 1.0
          %v670 = vmax.f32 %v654, 1.0
          %v671 = vmax.f32 %v655, 1.0
          %v672 = vmax.f32 %v656, 1.0
          %v673 = vmax.f32 %v657, 1.0
          %v674 = vmax.f32 %v658, 1.0
          %v675 = vmax.f32 %v659, 1.0
          %v676 = vmax.f32 %v660, 1.0
          %v677 = vmax.f32 %v661, 1.0
          %v678 = vmax.f32 %v662, 1.0
          %v679 = vmax.f32 %v663, 1.0
          %v680 = vmax.f32 %v664, 1.0
          %v681 = vmax.f32 %v665, 1.0
          %v682 = vmax.f32 %v666, 1.0
          %v683 = vmax.f32 %v667, 1.0
          %v684 = vmax.f32 %v668, 1.0
          %v685 = vrcp.pop %v669
          %v686 = vrcp.pop %v670
          %v687 = vrcp.pop %v671
          %v688 = vrcp.pop %v672
          %v689 = vrcp.pop %v673
          %v690 = vrcp.pop %v674
          %v691 = vrcp.pop %v675
          %v692 = vrcp.pop %v676
          %v693 = vrcp.pop %v677
          %v694 = vrcp.pop %v678
          %v695 = vrcp.pop %v679
          %v696 = vrcp.pop %v680
          %v697 = vrcp.pop %v681
          %v698 = vrcp.pop %v682
          %v699 = vrcp.pop %v683
          %v700 = vrcp.pop %v684
          %702 = vset.pattern.permute.xlu0 32
          %703 = vperm.xlu0 %702, %v685
          %v704 = vpop.permute.xlu0 %703
          %707 = vset.pattern.permute.xlu0 32
          %708 = vperm.xlu0 %707, %v686
          %v709 = vpop.permute.xlu0 %708
          %712 = vset.pattern.permute.xlu0 32
          %713 = vperm.xlu0 %712, %v687
          %v714 = vpop.permute.xlu0 %713
          %717 = vset.pattern.permute.xlu0 32
          %718 = vperm.xlu0 %717, %v688
          %v719 = vpop.permute.xlu0 %718
          %722 = vset.pattern.permute.xlu0 32
          %723 = vperm.xlu0 %722, %v689
          %v724 = vpop.permute.xlu0 %723
          %727 = vset.pattern.permute.xlu0 32
          %728 = vperm.xlu0 %727, %v690
          %v729 = vpop.permute.xlu0 %728
          %732 = vset.pattern.permute.xlu0 32
          %733 = vperm.xlu0 %732, %v691
          %v734 = vpop.permute.xlu0 %733
          %737 = vset.pattern.permute.xlu0 32
          %738 = vperm.xlu0 %737, %v692
          %v739 = vpop.permute.xlu0 %738
          %742 = vset.pattern.permute.xlu0 32
          %743 = vperm.xlu0 %742, %v693
          %v744 = vpop.permute.xlu0 %743
          %747 = vset.pattern.permute.xlu0 32
          %748 = vperm.xlu0 %747, %v694
          %v749 = vpop.permute.xlu0 %748
          %752 = vset.pattern.permute.xlu0 32
          %753 = vperm.xlu0 %752, %v695
          %v754 = vpop.permute.xlu0 %753
          %757 = vset.pattern.permute.xlu0 32
          %758 = vperm.xlu0 %757, %v696
          %v759 = vpop.permute.xlu0 %758
          %762 = vset.pattern.permute.xlu0 32
          %763 = vperm.xlu0 %762, %v697
          %v764 = vpop.permute.xlu0 %763
          %767 = vset.pattern.permute.xlu0 32
          %768 = vperm.xlu0 %767, %v698
          %v769 = vpop.permute.xlu0 %768
          %772 = vset.pattern.permute.xlu0 32
          %773 = vperm.xlu0 %772, %v699
          %v774 = vpop.permute.xlu0 %773
          %777 = vset.pattern.permute.xlu0 32
          %778 = vperm.xlu0 %777, %v700
          %v779 = vpop.permute.xlu0 %778
          %v781 = vmul.f32 %v653, %v704
          %v782 = vmul.f32 %v654, %v709
          %v783 = vmul.f32 %v655, %v714
          %v784 = vmul.f32 %v656, %v719
          %v785 = vmul.f32 %v657, %v724
          %v786 = vmul.f32 %v658, %v729
          %v787 = vmul.f32 %v659, %v734
          %v788 = vmul.f32 %v660, %v739
          %v789 = vmul.f32 %v661, %v744
          %v790 = vmul.f32 %v662, %v749
          %v791 = vmul.f32 %v663, %v754
          %v792 = vmul.f32 %v664, %v759
          %v793 = vmul.f32 %v665, %v764
          %v794 = vmul.f32 %v666, %v769
          %v795 = vmul.f32 %v667, %v774
          %v796 = vmul.f32 %v668, %v779
          %v797 = vld [vmem:[%s310] sm:$0xf]
          %v798 = vld [vmem:[%s310 + $0x4] sm:$0xf]
          %v799 = vld [vmem:[%s310 + $0x8] sm:$0xf]
          %v800 = vld [vmem:[%s310 + $0xc] sm:$0xf]
          %v801 = vld [vmem:[%s310 + $0x10] sm:$0xf]
          %v802 = vld [vmem:[%s310 + $0x14] sm:$0xf]
          %v803 = vld [vmem:[%s310 + $0x18] sm:$0xf]
          %v804 = vld [vmem:[%s310 + $0x1c] sm:$0xf]
          %v805 = vld [vmem:[%s310 + $0x20] sm:$0xf]
          %v806 = vld [vmem:[%s310 + $0x24] sm:$0xf]
          %v807 = vld [vmem:[%s310 + $0x28] sm:$0xf]
          %v808 = vld [vmem:[%s310 + $0x2c] sm:$0xf]
          %v809 = vld [vmem:[%s310 + $0x30] sm:$0xf]
          %v810 = vld [vmem:[%s310 + $0x34] sm:$0xf]
          %v811 = vld [vmem:[%s310 + $0x38] sm:$0xf]
          %v812 = vld [vmem:[%s310 + $0x3c] sm:$0xf]
          %v813 = vpack.c.bf16 %v782, %v781
          %v814 = vpack.c.bf16 %v784, %v783
          %v815 = vpack.c.bf16 %v786, %v785
          %v816 = vpack.c.bf16 %v788, %v787
          %v817 = vpack.c.bf16 %v790, %v789
          %v818 = vpack.c.bf16 %v792, %v791
          %v819 = vpack.c.bf16 %v794, %v793
          %v820 = vpack.c.bf16 %v796, %v795
          %v837 = vunpack.c.l.b16 %v797
          %v838 = vunpack.c.l.b16 %v798
          %v839 = vunpack.c.l.b16 %v799
          %v840 = vunpack.c.l.b16 %v800
          %v841 = vunpack.c.l.b16 %v801
          %v842 = vunpack.c.l.b16 %v802
          %v843 = vunpack.c.l.b16 %v803
          %v844 = vunpack.c.l.b16 %v804
          %v845 = vunpack.c.l.b16 %v805
          %v846 = vunpack.c.l.b16 %v806
          %v847 = vunpack.c.l.b16 %v807
          %v848 = vunpack.c.l.b16 %v808
          %v849 = vunpack.c.l.b16 %v809
          %v850 = vunpack.c.l.b16 %v810
          %v851 = vunpack.c.l.b16 %v811
          %v852 = vunpack.c.l.b16 %v812
          %v853 = vpack.c.b16 %v838, %v837
          %v854 = vpack.c.b16 %v840, %v839
          %v855 = vpack.c.b16 %v842, %v841
          %v856 = vpack.c.b16 %v844, %v843
          %v857 = vpack.c.b16 %v846, %v845
          %v858 = vpack.c.b16 %v848, %v847
          %v859 = vpack.c.b16 %v850, %v849
          %v860 = vpack.c.b16 %v852, %v851
          %v869 = vld [vmem:[#allocation9] sm:$0xf]
          %v870 = vld [vmem:[#allocation9 + $0x4] sm:$0xf]
          %v871 = vld [vmem:[#allocation9 + $0x8] sm:$0xf]
          %v872 = vld [vmem:[#allocation9 + $0xc] sm:$0xf]
          %v873 = vld [vmem:[#allocation9 + $0x10] sm:$0xf]
          %v874 = vld [vmem:[#allocation9 + $0x14] sm:$0xf]
          %v875 = vld [vmem:[#allocation9 + $0x18] sm:$0xf]
          %v876 = vld [vmem:[#allocation9 + $0x1c] sm:$0xf]
          %v877 = vld [vmem:[#allocation9 + $0x20] sm:$0xf]
          %v878 = vld [vmem:[#allocation9 + $0x24] sm:$0xf]
          %v879 = vld [vmem:[#allocation9 + $0x28] sm:$0xf]
          %v880 = vld [vmem:[#allocation9 + $0x2c] sm:$0xf]
          %v881 = vld [vmem:[#allocation9 + $0x30] sm:$0xf]
          %v882 = vld [vmem:[#allocation9 + $0x34] sm:$0xf]
          %v883 = vld [vmem:[#allocation9 + $0x38] sm:$0xf]
          %v884 = vld [vmem:[#allocation9 + $0x3c] sm:$0xf]
          %v885 = vld [vmem:[#allocation9 + $0x40] sm:$0xf]
          %v886 = vld [vmem:[#allocation9 + $0x44] sm:$0xf]
          %v887 = vld [vmem:[#allocation9 + $0x48] sm:$0xf]
          %v888 = vld [vmem:[#allocation9 + $0x4c] sm:$0xf]
          %v889 = vld [vmem:[#allocation9 + $0x50] sm:$0xf]
          %v890 = vld [vmem:[#allocation9 + $0x54] sm:$0xf]
          %v891 = vld [vmem:[#allocation9 + $0x58] sm:$0xf]
          %v892 = vld [vmem:[#allocation9 + $0x5c] sm:$0xf]
          %v893 = vld [vmem:[#allocation9 + $0x60] sm:$0xf]
          %v894 = vld [vmem:[#allocation9 + $0x64] sm:$0xf]
          %v895 = vld [vmem:[#allocation9 + $0x68] sm:$0xf]
          %v896 = vld [vmem:[#allocation9 + $0x6c] sm:$0xf]
          %v897 = vld [vmem:[#allocation9 + $0x70] sm:$0xf]
          %v898 = vld [vmem:[#allocation9 + $0x74] sm:$0xf]
          %v899 = vld [vmem:[#allocation9 + $0x78] sm:$0xf]
          %v900 = vld [vmem:[#allocation9 + $0x7c] sm:$0xf]
          %v901 = vld [vmem:[%s4] sm:$0x1]
          %v903 = vlaneseq
          %v904 = vshrl.u32 %v903, 7
          %v905 = vsub.s32 0, %v904
          %v906 = vrot.slane %v901, %v905
          %v940 = vunpack.c.l.b16 %v869
          %v941 = vunpack.c.l.b16 %v870
          %v942 = vunpack.c.l.b16 %v871
          %v943 = vunpack.c.l.b16 %v872
          %v944 = vunpack.c.l.b16 %v873
          %v945 = vunpack.c.l.b16 %v874
          %v946 = vunpack.c.l.b16 %v875
          %v947 = vunpack.c.l.b16 %v876
          %v948 = vunpack.c.l.b16 %v877
          %v949 = vunpack.c.l.b16 %v878
          %v950 = vunpack.c.l.b16 %v879
          %v951 = vunpack.c.l.b16 %v880
          %v952 = vunpack.c.l.b16 %v881
          %v953 = vunpack.c.l.b16 %v882
          %v954 = vunpack.c.l.b16 %v883
          %v955 = vunpack.c.l.b16 %v884
          %v956 = vunpack.c.l.b16 %v885
          %v957 = vunpack.c.l.b16 %v886
          %v958 = vunpack.c.l.b16 %v887
          %v959 = vunpack.c.l.b16 %v888
          %v960 = vunpack.c.l.b16 %v889
          %v961 = vunpack.c.l.b16 %v890
          %v962 = vunpack.c.l.b16 %v891
          %v963 = vunpack.c.l.b16 %v892
          %v964 = vunpack.c.l.b16 %v893
          %v965 = vunpack.c.l.b16 %v894
          %v966 = vunpack.c.l.b16 %v895
          %v967 = vunpack.c.l.b16 %v896
          %v968 = vunpack.c.l.b16 %v897
          %v969 = vunpack.c.l.b16 %v898
          %v970 = vunpack.c.l.b16 %v899
          %v971 = vunpack.c.l.b16 %v900
          %v972 = vpack.c.b16 %v941, %v940
          %v973 = vpack.c.b16 %v943, %v942
          %v974 = vpack.c.b16 %v945, %v944
          %v975 = vpack.c.b16 %v947, %v946
          %v976 = vpack.c.b16 %v949, %v948
          %v977 = vpack.c.b16 %v951, %v950
          %v978 = vpack.c.b16 %v953, %v952
          %v979 = vpack.c.b16 %v955, %v954
          %v980 = vpack.c.b16 %v957, %v956
          %v981 = vpack.c.b16 %v959, %v958
          %v982 = vpack.c.b16 %v961, %v960
          %v983 = vpack.c.b16 %v963, %v962
          %v984 = vpack.c.b16 %v965, %v964
          %v985 = vpack.c.b16 %v967, %v966
          %v986 = vpack.c.b16 %v969, %v968
          %v987 = vpack.c.b16 %v971, %v970
          %1004 = vmatprep.subr.bf16.mxu0 0
          %1005 = vmatpush1.bf16.msra.mxu0 %v972
          %1006 = vmatprep.subr.bf16.mxu0 0
          %1007 = vmatpush1.bf16.msra.mxu0 %v973
          %1008 = vmatprep.subr.bf16.mxu0 0
          %1009 = vmatpush1.bf16.msra.mxu0 %v974
          %1010 = vmatprep.subr.bf16.mxu0 0
          %1011 = vmatpush1.bf16.msra.mxu0 %v975
          %1012 = vmatprep.subr.bf16.mxu0 0
          %1013 = vmatpush1.bf16.msra.mxu0 %v976
          %1014 = vmatprep.subr.bf16.mxu0 0
          %1015 = vmatpush1.bf16.msra.mxu0 %v977
          %1016 = vmatprep.subr.bf16.mxu0 0
          %1017 = vmatpush1.bf16.msra.mxu0 %v978
          %1018 = vmatprep.subr.bf16.mxu0 0
          %1019 = vmatpush1.bf16.msra.mxu0 %v979
          %1020 = vmatprep.subr.bf16.mxu0 0
          %1021 = vmatpush1.bf16.msra.mxu0 %v980
          %1022 = vmatprep.subr.bf16.mxu0 0
          %1023 = vmatpush1.bf16.msra.mxu0 %v981
          %1024 = vmatprep.subr.bf16.mxu0 0
          %1025 = vmatpush1.bf16.msra.mxu0 %v982
          %1026 = vmatprep.subr.bf16.mxu0 0
          %1027 = vmatpush1.bf16.msra.mxu0 %v983
          %1028 = vmatprep.subr.bf16.mxu0 0
          %1029 = vmatpush1.bf16.msra.mxu0 %v984
          %1030 = vmatprep.subr.bf16.mxu0 0
          %1031 = vmatpush1.bf16.msra.mxu0 %v985
          %1032 = vmatprep.subr.bf16.mxu0 0
          %1033 = vmatpush1.bf16.msra.mxu0 %v986
          %1034 = vmatprep.subr.bf16.mxu0 0
          %1035 = vmatpush1.bf16.msra.mxu0 %v987
          %1036 = vmatprep.mubr.bf16.mxu0 %v813
          %1037 = vmatmul.mubr.bf16.gmra.mrb[0].mxu0 %v853
          %v1038 = vpop.f32.mrb[0].mxu0
          %v1039 = vadd.f32 %v906, %v1038
          %v1040 = vpop.f32.mrb[0].mxu0
          %v1041 = vpop.f32.mrb[0].mxu0
          %v1042 = vadd.f32 %v906, %v1041
          %v1043 = vpop.f32.mrb[0].mxu0
          %1044 = vmatprep.mubr.bf16.mxu0 %v814
          %1045 = vmatmul.mubr.bf16.gmra.mrb[0].mxu0 %v854
          %v1046 = vpop.f32.mrb[0].mxu0
          %v1047 = vadd.f32 %v906, %v1046
          %v1048 = vpop.f32.mrb[0].mxu0
          %v1049 = vpop.f32.mrb[0].mxu0
          %v1050 = vadd.f32 %v906, %v1049
          %v1051 = vpop.f32.mrb[0].mxu0
          %1052 = vmatprep.mubr.bf16.mxu0 %v815
          %1053 = vmatmul.mubr.bf16.gmra.mrb[0].mxu0 %v855
          %v1054 = vpop.f32.mrb[0].mxu0
          %v1055 = vadd.f32 %v906, %v1054
          %v1056 = vpop.f32.mrb[0].mxu0
          %v1057 = vpop.f32.mrb[0].mxu0
          %v1058 = vadd.f32 %v906, %v1057
          %v1059 = vpop.f32.mrb[0].mxu0
          %1060 = vmatprep.mubr.bf16.mxu0 %v816
          %1061 = vmatmul.mubr.bf16.gmra.mrb[0].mxu0 %v856
          %v1062 = vpop.f32.mrb[0].mxu0
          %v1063 = vadd.f32 %v906, %v1062
          %v1064 = vpop.f32.mrb[0].mxu0
          %v1065 = vpop.f32.mrb[0].mxu0
          %v1066 = vadd.f32 %v906, %v1065
          %v1067 = vpop.f32.mrb[0].mxu0
          %1068 = vmatprep.mubr.bf16.mxu0 %v817
          %1069 = vmatmul.mubr.bf16.gmra.mrb[0].mxu0 %v857
          %v1070 = vpop.f32.mrb[0].mxu0
          %v1071 = vadd.f32 %v906, %v1070
          %v1072 = vpop.f32.mrb[0].mxu0
          %v1073 = vpop.f32.mrb[0].mxu0
          %v1074 = vadd.f32 %v906, %v1073
          %v1075 = vpop.f32.mrb[0].mxu0
          %1076 = vmatprep.mubr.bf16.mxu0 %v818
          %1077 = vmatmul.mubr.bf16.gmra.mrb[0].mxu0 %v858
          %v1078 = vpop.f32.mrb[0].mxu0
          %v1079 = vadd.f32 %v906, %v1078
          %v1080 = vpop.f32.mrb[0].mxu0
          %v1081 = vpop.f32.mrb[0].mxu0
          %v1082 = vadd.f32 %v906, %v1081
          %v1083 = vpop.f32.mrb[0].mxu0
          %1084 = vmatprep.mubr.bf16.mxu0 %v819
          %1085 = vmatmul.mubr.bf16.gmra.mrb[0].mxu0 %v859
          %v1086 = vpop.f32.mrb[0].mxu0
          %v1087 = vadd.f32 %v906, %v1086
          %v1088 = vpop.f32.mrb[0].mxu0
          %v1089 = vpop.f32.mrb[0].mxu0
          %v1090 = vadd.f32 %v906, %v1089
          %v1091 = vpop.f32.mrb[0].mxu0
          %1092 = vmatprep.mubr.bf16.mxu0 %v820
          %1093 = vmatmul.mubr.bf16.gmra.mrb[0].mxu0 %v860
          %v1094 = vpop.f32.mrb[0].mxu0
          %v1095 = vadd.f32 %v906, %v1094
          %v1096 = vpop.f32.mrb[0].mxu0
          %v1097 = vpop.f32.mrb[0].mxu0
          %v1098 = vadd.f32 %v906, %v1097
          %v1099 = vpop.f32.mrb[0].mxu0
          %1100 = vdwg.mxu0
          %vm1101 = vcmp.gt.f32.partialorder %v1039, 0.0
          %vm1102 = vcmp.gt.f32.partialorder %v1042, 0.0
          %vm1103 = vcmp.gt.f32.partialorder %v1047, 0.0
          %vm1104 = vcmp.gt.f32.partialorder %v1050, 0.0
          %vm1105 = vcmp.gt.f32.partialorder %v1055, 0.0
          %vm1106 = vcmp.gt.f32.partialorder %v1058, 0.0
          %vm1107 = vcmp.gt.f32.partialorder %v1063, 0.0
          %vm1108 = vcmp.gt.f32.partialorder %v1066, 0.0
          %vm1109 = vcmp.gt.f32.partialorder %v1071, 0.0
          %vm1110 = vcmp.gt.f32.partialorder %v1074, 0.0
          %vm1111 = vcmp.gt.f32.partialorder %v1079, 0.0
          %vm1112 = vcmp.gt.f32.partialorder %v1082, 0.0
          %vm1113 = vcmp.gt.f32.partialorder %v1087, 0.0
          %vm1114 = vcmp.gt.f32.partialorder %v1090, 0.0
          %vm1115 = vcmp.gt.f32.partialorder %v1095, 0.0
          %vm1116 = vcmp.gt.f32.partialorder %v1098, 0.0
          %v1117 = vmul.f32 %v1039, 0.01
          %v1118 = vmul.f32 %v1042, 0.01
          %v1119 = vmul.f32 %v1047, 0.01
          %v1120 = vmul.f32 %v1050, 0.01
          %v1121 = vmul.f32 %v1055, 0.01
          %v1122 = vmul.f32 %v1058, 0.01
          %v1123 = vmul.f32 %v1063, 0.01
          %v1124 = vmul.f32 %v1066, 0.01
          %v1125 = vmul.f32 %v1071, 0.01
          %v1126 = vmul.f32 %v1074, 0.01
          %v1127 = vmul.f32 %v1079, 0.01
          %v1128 = vmul.f32 %v1082, 0.01
          %v1129 = vmul.f32 %v1087, 0.01
          %v1130 = vmul.f32 %v1090, 0.01
          %v1131 = vmul.f32 %v1095, 0.01
          %v1132 = vmul.f32 %v1098, 0.01
          %v1133 = vsel %vm1101, %v1039, %v1117
          %v1134 = vsel %vm1102, %v1042, %v1118
          %v1135 = vsel %vm1103, %v1047, %v1119
          %v1136 = vsel %vm1104, %v1050, %v1120
          %v1137 = vsel %vm1105, %v1055, %v1121
          %v1138 = vsel %vm1106, %v1058, %v1122
          %v1139 = vsel %vm1107, %v1063, %v1123
          %v1140 = vsel %vm1108, %v1066, %v1124
          %v1141 = vsel %vm1109, %v1071, %v1125
          %v1142 = vsel %vm1110, %v1074, %v1126
          %v1143 = vsel %vm1111, %v1079, %v1127
          %v1144 = vsel %vm1112, %v1082, %v1128
          %v1145 = vsel %vm1113, %v1087, %v1129
          %v1146 = vsel %vm1114, %v1090, %v1130
          %v1147 = vsel %vm1115, %v1095, %v1131
          %v1148 = vsel %vm1116, %v1098, %v1132
          %v1149 = vmul.f32 %v1133, %v1133
          %v1150 = vmul.f32 %v1134, %v1134
          %v1151 = vmul.f32 %v1135, %v1135
          %v1152 = vmul.f32 %v1136, %v1136
          %v1153 = vmul.f32 %v1137, %v1137
          %v1154 = vmul.f32 %v1138, %v1138
          %v1155 = vmul.f32 %v1139, %v1139
          %v1156 = vmul.f32 %v1140, %v1140
          %v1157 = vmul.f32 %v1141, %v1141
          %v1158 = vmul.f32 %v1142, %v1142
          %v1159 = vmul.f32 %v1143, %v1143
          %v1160 = vmul.f32 %v1144, %v1144
          %v1161 = vmul.f32 %v1145, %v1145
          %v1162 = vmul.f32 %v1146, %v1146
          %v1163 = vmul.f32 %v1147, %v1147
          %v1164 = vmul.f32 %v1148, %v1148
          %1165 = vadd.xlane.f32.xlu0 %v1149
          %v1166 = vpop.xlane.xlu0 %1165
          %1167 = vadd.xlane.f32.xlu0 %v1150
          %v1168 = vpop.xlane.xlu0 %1167
          %1169 = vadd.xlane.f32.xlu0 %v1151
          %v1170 = vpop.xlane.xlu0 %1169
          %1171 = vadd.xlane.f32.xlu0 %v1152
          %v1172 = vpop.xlane.xlu0 %1171
          %1173 = vadd.xlane.f32.xlu0 %v1153
          %v1174 = vpop.xlane.xlu0 %1173
          %1175 = vadd.xlane.f32.xlu0 %v1154
          %v1176 = vpop.xlane.xlu0 %1175
          %1177 = vadd.xlane.f32.xlu0 %v1155
          %v1178 = vpop.xlane.xlu0 %1177
          %1179 = vadd.xlane.f32.xlu0 %v1156
          %v1180 = vpop.xlane.xlu0 %1179
          %1181 = vadd.xlane.f32.xlu0 %v1157
          %v1182 = vpop.xlane.xlu0 %1181
          %1183 = vadd.xlane.f32.xlu0 %v1158
          %v1184 = vpop.xlane.xlu0 %1183
          %1185 = vadd.xlane.f32.xlu0 %v1159
          %v1186 = vpop.xlane.xlu0 %1185
          %1187 = vadd.xlane.f32.xlu0 %v1160
          %v1188 = vpop.xlane.xlu0 %1187
          %1189 = vadd.xlane.f32.xlu0 %v1161
          %v1190 = vpop.xlane.xlu0 %1189
          %1191 = vadd.xlane.f32.xlu0 %v1162
          %v1192 = vpop.xlane.xlu0 %1191
          %1193 = vadd.xlane.f32.xlu0 %v1163
          %v1194 = vpop.xlane.xlu0 %1193
          %1195 = vadd.xlane.f32.xlu0 %v1164
          %v1196 = vpop.xlane.xlu0 %1195
          %v1197 = vmax.f32 %v1166, 1e-24
          %v1198 = vmax.f32 %v1168, 1e-24
          %v1199 = vmax.f32 %v1170, 1e-24
          %v1200 = vmax.f32 %v1172, 1e-24
          %v1201 = vmax.f32 %v1174, 1e-24
          %v1202 = vmax.f32 %v1176, 1e-24
          %v1203 = vmax.f32 %v1178, 1e-24
          %v1204 = vmax.f32 %v1180, 1e-24
          %v1205 = vmax.f32 %v1182, 1e-24
          %v1206 = vmax.f32 %v1184, 1e-24
          %v1207 = vmax.f32 %v1186, 1e-24
          %v1208 = vmax.f32 %v1188, 1e-24
          %v1209 = vmax.f32 %v1190, 1e-24
          %v1210 = vmax.f32 %v1192, 1e-24
          %v1211 = vmax.f32 %v1194, 1e-24
          %v1212 = vmax.f32 %v1196, 1e-24
          %v1213 = vrsqrt.pop %v1197
          %v1214 = vrsqrt.pop %v1198
          %v1215 = vrsqrt.pop %v1199
          %v1216 = vrsqrt.pop %v1200
          %v1217 = vrsqrt.pop %v1201
          %v1218 = vrsqrt.pop %v1202
          %v1219 = vrsqrt.pop %v1203
          %v1220 = vrsqrt.pop %v1204
          %v1221 = vrsqrt.pop %v1205
          %v1222 = vrsqrt.pop %v1206
          %v1223 = vrsqrt.pop %v1207
          %v1224 = vrsqrt.pop %v1208
          %v1225 = vrsqrt.pop %v1209
          %v1226 = vrsqrt.pop %v1210
          %v1227 = vrsqrt.pop %v1211
          %v1228 = vrsqrt.pop %v1212
          %v1229 = vmul.f32 %v1133, %v1213
          %v1230 = vmul.f32 %v1134, %v1214
          %v1231 = vmul.f32 %v1135, %v1215
          %v1232 = vmul.f32 %v1136, %v1216
          %v1233 = vmul.f32 %v1137, %v1217
          %v1234 = vmul.f32 %v1138, %v1218
          %v1235 = vmul.f32 %v1139, %v1219
          %v1236 = vmul.f32 %v1140, %v1220
          %v1237 = vmul.f32 %v1141, %v1221
          %v1238 = vmul.f32 %v1142, %v1222
          %v1239 = vmul.f32 %v1143, %v1223
          %v1240 = vmul.f32 %v1144, %v1224
          %v1241 = vmul.f32 %v1145, %v1225
          %v1242 = vmul.f32 %v1146, %v1226
          %v1243 = vmul.f32 %v1147, %v1227
          %v1244 = vmul.f32 %v1148, %v1228
          %1245 = vst [vmem:[%s350] sm:$0xff] %v1229
          %1246 = vst [vmem:[%s350 + $0x8] sm:$0xff] %v1230
          %1247 = vst [vmem:[%s350 + $0x10] sm:$0xff] %v1231
          %1248 = vst [vmem:[%s350 + $0x18] sm:$0xff] %v1232
          %1249 = vst [vmem:[%s350 + $0x20] sm:$0xff] %v1233
          %1250 = vst [vmem:[%s350 + $0x28] sm:$0xff] %v1234
          %1251 = vst [vmem:[%s350 + $0x30] sm:$0xff] %v1235
          %1252 = vst [vmem:[%s350 + $0x38] sm:$0xff] %v1236
          %1253 = vst [vmem:[%s350 + $0x40] sm:$0xff] %v1237
          %1254 = vst [vmem:[%s350 + $0x48] sm:$0xff] %v1238
          %1255 = vst [vmem:[%s350 + $0x50] sm:$0xff] %v1239
          %1256 = vst [vmem:[%s350 + $0x58] sm:$0xff] %v1240
          %1257 = vst [vmem:[%s350 + $0x60] sm:$0xff] %v1241
          %1258 = vst [vmem:[%s350 + $0x68] sm:$0xff] %v1242
          %1259 = vst [vmem:[%s350 + $0x70] sm:$0xff] %v1243
          %1260 = vst [vmem:[%s350 + $0x78] sm:$0xff] %v1244
        $region64: #{tpu_custom_call.1} parent=39 // pred_fallthru
          _
        %s1261 = sand.u32 %s168, 1
        %s1262 = scalar_lea.sflag [#allocation5], %s1261
        %s1263 = sand.u32 %s168, 1
        %s1264 = smul.addr %s1263, 128
        %s1265 = scalar_lea.vmem [#allocation11], %s1264
        // Predicated region
        $region65: #{tpu_custom_call.1} parent=39 // pred_check
          %p1266 = pneg %p178
        $region66: #{tpu_custom_call.1} parent=39 // pred_check_branch
          %1268 = sbr.rel (%p1266) target = $region68
        $region67: #{tpu_custom_call.1} parent=39 // pred_region
          %s1269 = smul.u32 16, %s30
          %s1271 = ssub.s32 2048, 2048
          %1272 = vsyncadd %s1262, %s1271
          %s1273 = smul.addr %s1269, 128
          %s1274 = scalar_lea.hbm %s5, %s1273
          %s1275 = sshll.u32 %s1265, 4
          %s1276 = int_to_ptr.vmem [resolvable:$true] %s1275
          %1281 = dma.vmem_to_hbm [thread:$0]  %s1276, 2048, %s1274, %s1262, 128, 128, 8
        $region68: #{tpu_custom_call.1} parent=39 // pred_fallthru
          _
      $region40: #{tpu_custom_call.1} parent=5 // pred_fallthru
        _
      %p1282 = scmp.le.s32.totalorder 2, %s21
      // Predicated region
      $region69: #{tpu_custom_call.1} parent=5 // pred_check
        %p1283 = pneg %p1282
      $region70: #{tpu_custom_call.1} parent=5 // pred_check_branch
        %1285 = sbr.rel (%p1283) target = $region72
      $region71: #{tpu_custom_call.1} parent=5 // pred_region
        %s1286 = ssub.s32 %s21, 2
        // Predicated region
        $region73: #{tpu_custom_call.1} parent=71 // pred_check
          %p1287 = pneg %p184
        $region74: #{tpu_custom_call.1} parent=71 // pred_check_branch
          %1289 = sbr.rel (%p1287) target = $region76
        $region75: #{tpu_custom_call.1} parent=71 // pred_region
          %s1290 = sand.u32 %s169, 1
          %s1291 = scalar_lea.sflag [#allocation5], %s1290
          %s1292 = sand.u32 %s169, 1
          %s1293 = smul.addr %s1292, 128
          %s1294 = scalar_lea.vmem [#allocation11], %s1293
          %1295 = dma.done %s1291, 2048
        $region76: #{tpu_custom_call.1} parent=71 // pred_fallthru
          _
      $region72: #{tpu_custom_call.1} parent=5 // pred_fallthru
        _
    $region6: #{tpu_custom_call.1} parent=1 // loop_footer
      %s25 = sadd.s32 1, %s21
    $region7: #{tpu_custom_call.1} parent=1 // loop_footer_branch
      %20 = sbr.rel target = $region3
    $region8: #{tpu_custom_call.1} parent=1 // loop_exit
      _
    %1296 = vsyncpa [#allocation4], 1
    %s1297 = scalar_lea.sflag [#allocation4], 1
    %1298 = vsyncpa %s1297, 1
    %1299 = vsyncpa [#allocation7], 1
    %s1300 = scalar_lea.sflag [#allocation7], 1
    %1301 = vsyncpa %s1300, 1
    %1302 = vsyncpa [#allocation10], 1
    %1303 = vsyncpa [#allocation5], 1
    %s1304 = scalar_lea.sflag [#allocation5], 1
    %1305 = vsyncpa %s1304, 1

</llo_original>
